<compile_context>
chip_gen: v5e
topology: v5e:2x2
jax: 0.10.0
libtpu: 0.0.40
codegen_flags: <defaults>
</compile_context>

<pallas_src>
import functools

import jax
import jax.numpy as jnp
from jax.experimental import pallas as pl
from jax.experimental.pallas import tpu as pltpu

IN_FEATURES = 28 * 28   # 784 (equals full array dim -> legal last block dim)
H_PAD = 128             # hidden dims 30 -> padded to one lane-dense width
OUT_FEATURES = 10       # real output width; kernel writes exactly this
DEFAULT_TILE_B = 2048   # explicit vmem_limit_bytes keeps this safe on v5e/v6e/v7x


def _round_up(n, m):
    return ((n + m - 1) // m) * m


def mlp_kernel(x_ref, w1_ref, b1_ref, w2_ref, b2_ref, w3_ref, b3_ref, o_ref):
    # x_ref: (TILE_B, 784) f32; w*: bf16 (in, out); b*: f32 (1, out); o_ref: (TILE_B, 10) f32
    x = x_ref[...].astype(jnp.bfloat16)                       # cast in-kernel (no extra HBM trip)
    h1 = jax.nn.sigmoid(
        jnp.dot(x, w1_ref[...], preferred_element_type=jnp.float32) + b1_ref[...])
    h2 = jax.nn.sigmoid(
        jnp.dot(h1.astype(jnp.bfloat16), w2_ref[...],
                preferred_element_type=jnp.float32) + b2_ref[...])
    h3 = jnp.dot(h2.astype(jnp.bfloat16), w3_ref[...],
                 preferred_element_type=jnp.float32) + b3_ref[...]
    o_ref[...] = jax.nn.sigmoid(h3).astype(o_ref.dtype)


def prepare_params(params):
    """One-time: transpose to (in, out), zero-pad hidden dims to 128, cast weights to bf16.

    Zero-padded weight columns + zero-padded bias make padded hidden activations
    sigmoid(0)=0.5, which then multiply zero-padded weight *rows* of the next layer
    and contribute exactly 0 — the 10 real output columns match the unpadded math.
    """
    w1, b1, w2, b2, w3, b3 = params

    def pad2(a, rows, cols):
        return jnp.pad(a, ((0, rows - a.shape[0]), (0, cols - a.shape[1])))

    w1p = pad2(w1.T.astype(jnp.float32), IN_FEATURES, H_PAD).astype(jnp.bfloat16)
    w2p = pad2(w2.T.astype(jnp.float32), H_PAD, H_PAD).astype(jnp.bfloat16)
    w3p = pad2(w3.T.astype(jnp.float32), H_PAD, OUT_FEATURES).astype(jnp.bfloat16)
    b1p = pad2(b1.reshape(1, -1).astype(jnp.float32), 1, H_PAD)
    b2p = pad2(b2.reshape(1, -1).astype(jnp.float32), 1, H_PAD)
    b3p = b3.reshape(1, -1).astype(jnp.float32)               # (1, 10), no padding needed
    return (w1p, b1p, w2p, b2p, w3p, b3p)


def _choose_tile(B, tile_b):
    """Balanced batch tiling: >=8 rows, <= tile_b, >=4 tiles for large B (v7x megacore),
    and padding capped at <8 rows per tile."""
    tb_cap = max(8, _round_up(pl.cdiv(B, 4), 8))   # aim for >= 4 tiles when B is big enough
    tb = min(tile_b, tb_cap)
    n_tiles = pl.cdiv(B, tb)
    tb = _round_up(pl.cdiv(B, n_tiles), 8)         # rebalance so padding < 8 rows/tile
    return tb, n_tiles * tb


@functools.partial(jax.jit, static_argnames=("tile_b",))
def neural_network_forward(x, prepared, tile_b=DEFAULT_TILE_B):
    """x: (B, 1, 28, 28) float32 (NCHW, like PyTorch). Returns (B, 10) float32."""
    w1p, b1p, w2p, b2p, w3p, b3p = prepared
    B = x.shape[0]
    x_flat = x.reshape(B, IN_FEATURES)  # nn.Flatten: flatten all dims after batch

    tb, b_pad = _choose_tile(B, tile_b)
    if b_pad != B:
        x_flat = jnp.pad(x_flat, ((0, b_pad - B), (0, 0)))
    grid = (b_pad // tb,)

    flops = 2 * b_pad * (IN_FEATURES * H_PAD + H_PAD * H_PAD + H_PAD * OUT_FEATURES)
    transcendentals = b_pad * (H_PAD + H_PAD + OUT_FEATURES)
    bytes_accessed = (
        4 * b_pad * (IN_FEATURES + OUT_FEATURES)
        + 2 * (IN_FEATURES * H_PAD + H_PAD * H_PAD + H_PAD * OUT_FEATURES)
        + 4 * (2 * H_PAD + OUT_FEATURES))

    # VMEM budget: double-buffered x + out, double-buffered bf16 weights,
    # in-kernel bf16/f32 intermediates, +50% headroom, capped below v7x physical.
    vmem_est = (
        2 * tb * IN_FEATURES * 4
        + 2 * tb * OUT_FEATURES * 4
        + 2 * 2 * (IN_FEATURES * H_PAD + H_PAD * H_PAD + H_PAD * OUT_FEATURES)
        + tb * (IN_FEATURES * 2 + 3 * H_PAD * 4 + OUT_FEATURES * 4))
    vmem_limit = int(min(48 * 1024 * 1024, max(8 * 1024 * 1024, 1.5 * vmem_est)))

    # Weights/biases: constant block index -> stay VMEM-resident across batch tiles.
    resident = lambda shape: pl.BlockSpec(shape, lambda i: (0, 0))

    out = pl.pallas_call(
        mlp_kernel,
        out_shape=jax.ShapeDtypeStruct((b_pad, OUT_FEATURES), jnp.float32),
        grid=grid,
        in_specs=[
            pl.BlockSpec((tb, IN_FEATURES), lambda i: (i, 0)),   # streamed x tiles
            resident(w1p.shape), resident(b1p.shape),
            resident(w2p.shape), resident(b2p.shape),
            resident(w3p.shape), resident(b3p.shape),
        ],
        out_specs=pl.BlockSpec((tb, OUT_FEATURES), lambda i: (i, 0)),
        compiler_params=pltpu.CompilerParams(
            dimension_semantics=("parallel",),
            vmem_limit_bytes=vmem_limit),
        cost_estimate=pl.CostEstimate(
            flops=flops,
            transcendentals=transcendentals,
            bytes_accessed=bytes_accessed),
    )(x_flat, w1p, b1p, w2p, b2p, w3p, b3p)

    # Output is exactly 10 columns wide; only padded batch rows are sliced off.
    return out[:B] if b_pad != B else out


def init_params(key):
    # Matches nn.Linear default init: U(-1/sqrt(fan_in), 1/sqrt(fan_in))
    def linear(key, out_f, in_f):
        kw, kb = jax.random.split(key)
        bound = 1.0 / jnp.sqrt(in_f)
        w = jax.random.uniform(kw, (out_f, in_f), jnp.float32, -bound, bound)
        b = jax.random.uniform(kb, (out_f,), jnp.float32, -bound, bound)
        return w, b

    k1, k2, k3 = jax.random.split(key, 3)
    w1, b1 = linear(k1, 30, 28 * 28)
    w2, b2 = linear(k2, 30, 30)
    w3, b3 = linear(k3, 10, 30)
    return (w1, b1, w2, b2, w3, b3)


if __name__ == "__main__":
    key = jax.random.PRNGKey(0)
    k_params, k_x = jax.random.split(key)
    params = init_params(k_params)
    prepared = prepare_params(params)   # one-time transpose + 128-padding + bf16 cast

    B = 2
    x = jax.random.normal(k_x, (B, 1, 28, 28), jnp.float32)

    logits = neural_network_forward(x, prepared)
    jax.block_until_ready(logits)

    # Pure-JAX f32 reference check (bf16 matmul inputs -> loosened tolerance)
    w1, b1, w2, b2, w3, b3 = params
    xf = x.reshape(B, -1)
    ref = jax.nn.sigmoid(
        jax.nn.sigmoid(jax.nn.sigmoid(xf @ w1.T + b1) @ w2.T + b2) @ w3.T + b3
    )
    assert logits.shape == (B, 10)
    assert jnp.allclose(logits, ref, atol=1e-2, rtol=1e-2)

    print("KERNEL_OK")
</pallas_src>

<mosaic_0001>
module attributes {stable_mosaic.version = 11 : i64} {
  func.func @mlp_kernel(%arg0: i32, %arg1: memref<8x784xf32, #tpu.memory_space<vmem>>, %arg2: memref<784x128xbf16, #tpu.memory_space<vmem>>, %arg3: memref<1x128xf32, #tpu.memory_space<vmem>>, %arg4: memref<128x128xbf16, #tpu.memory_space<vmem>>, %arg5: memref<1x128xf32, #tpu.memory_space<vmem>>, %arg6: memref<128x10xbf16, #tpu.memory_space<vmem>>, %arg7: memref<1x10xf32, #tpu.memory_space<vmem>>, %arg8: memref<8x10xf32, #tpu.memory_space<vmem>>) attributes {dimension_semantics = [#tpu.dimension_semantics<parallel>], iteration_bounds = array<i64: 1>, scalar_prefetch = 0 : i64, scratch_operands = 0 : i64, tpu.core_type = #tpu.core_type<tc>, window_params = [{transform_indices = @transform_0, window_bounds = array<i64: 8, 784>}, {pipeline_mode = #tpu.pipeline_mode<synchronous>, transform_indices = @transform_1, window_bounds = array<i64: 784, 128>}, {pipeline_mode = #tpu.pipeline_mode<synchronous>, transform_indices = @transform_2, window_bounds = array<i64: 1, 128>}, {pipeline_mode = #tpu.pipeline_mode<synchronous>, transform_indices = @transform_3, window_bounds = array<i64: 128, 128>}, {pipeline_mode = #tpu.pipeline_mode<synchronous>, transform_indices = @transform_4, window_bounds = array<i64: 1, 128>}, {pipeline_mode = #tpu.pipeline_mode<synchronous>, transform_indices = @transform_5, window_bounds = array<i64: 128, 10>}, {pipeline_mode = #tpu.pipeline_mode<synchronous>, transform_indices = @transform_6, window_bounds = array<i64: 1, 10>}, {transform_indices = @transform_7, window_bounds = array<i64: 8, 10>}]} {
    %c0 = arith.constant 0 : index
    %c0_0 = arith.constant 0 : index
    %0 = vector.load %arg1[%c0, %c0_0] : memref<8x784xf32, #tpu.memory_space<vmem>>, vector<8x784xf32>
    %1 = arith.truncf %0 : vector<8x784xf32> to vector<8x784xbf16>
    %c0_1 = arith.constant 0 : index
    %c0_2 = arith.constant 0 : index
    %2 = vector.load %arg2[%c0_1, %c0_2] : memref<784x128xbf16, #tpu.memory_space<vmem>>, vector<784x128xbf16>
    %cst = arith.constant dense<0.000000e+00> : vector<8x128xf32>
    %3 = tpu.matmul %1, %2, %cst {dimension_numbers = #tpu.dot_dimension_numbers<[1], [0], [0], [1], [0, 0, 1, 1], [], []>} : vector<8x784xbf16>, vector<784x128xbf16>, vector<8x128xf32> -> vector<8x128xf32>
    %c0_3 = arith.constant 0 : index
    %c0_4 = arith.constant 0 : index
    %4 = vector.load %arg3[%c0_3, %c0_4] : memref<1x128xf32, #tpu.memory_space<vmem>>, vector<1x128xf32>
    %5 = vector.broadcast %4 : vector<1x128xf32> to vector<8x128xf32>
    %6 = arith.addf %3, %5 : vector<8x128xf32>
    %7 = arith.negf %6 : vector<8x128xf32>
    %8 = math.exp %7 : vector<8x128xf32>
    %cst_5 = arith.constant 1.000000e+00 : f32
    %9 = vector.broadcast %cst_5 : f32 to vector<8x128xf32>
    %10 = arith.addf %9, %8 : vector<8x128xf32>
    %11 = arith.divf %9, %10 : vector<8x128xf32>
    %12 = arith.truncf %11 : vector<8x128xf32> to vector<8x128xbf16>
    %c0_6 = arith.constant 0 : index
    %c0_7 = arith.constant 0 : index
    %13 = vector.load %arg4[%c0_6, %c0_7] : memref<128x128xbf16, #tpu.memory_space<vmem>>, vector<128x128xbf16>
    %cst_8 = arith.constant dense<0.000000e+00> : vector<8x128xf32>
    %14 = tpu.matmul %12, %13, %cst_8 {dimension_numbers = #tpu.dot_dimension_numbers<[1], [0], [0], [1], [0, 0, 1, 1], [], []>} : vector<8x128xbf16>, vector<128x128xbf16>, vector<8x128xf32> -> vector<8x128xf32>
    %c0_9 = arith.constant 0 : index
    %c0_10 = arith.constant 0 : index
    %15 = vector.load %arg5[%c0_9, %c0_10] : memref<1x128xf32, #tpu.memory_space<vmem>>, vector<1x128xf32>
    %16 = vector.broadcast %15 : vector<1x128xf32> to vector<8x128xf32>
    %17 = arith.addf %14, %16 : vector<8x128xf32>
    %18 = arith.negf %17 : vector<8x128xf32>
    %19 = math.exp %18 : vector<8x128xf32>
    %cst_11 = arith.constant 1.000000e+00 : f32
    %20 = vector.broadcast %cst_11 : f32 to vector<8x128xf32>
    %21 = arith.addf %20, %19 : vector<8x128xf32>
    %22 = arith.divf %20, %21 : vector<8x128xf32>
    %23 = arith.truncf %22 : vector<8x128xf32> to vector<8x128xbf16>
    %c0_12 = arith.constant 0 : index
    %c0_13 = arith.constant 0 : index
    %24 = vector.load %arg6[%c0_12, %c0_13] : memref<128x10xbf16, #tpu.memory_space<vmem>>, vector<128x10xbf16>
    %cst_14 = arith.constant dense<0.000000e+00> : vector<8x10xf32>
    %25 = tpu.matmul %23, %24, %cst_14 {dimension_numbers = #tpu.dot_dimension_numbers<[1], [0], [0], [1], [0, 0, 1, 1], [], []>} : vector<8x128xbf16>, vector<128x10xbf16>, vector<8x10xf32> -> vector<8x10xf32>
    %c0_15 = arith.constant 0 : index
    %c0_16 = arith.constant 0 : index
    %26 = vector.load %arg7[%c0_15, %c0_16] : memref<1x10xf32, #tpu.memory_space<vmem>>, vector<1x10xf32>
    %27 = vector.broadcast %26 : vector<1x10xf32> to vector<8x10xf32>
    %28 = arith.addf %25, %27 : vector<8x10xf32>
    %29 = arith.negf %28 : vector<8x10xf32>
    %30 = math.exp %29 : vector<8x10xf32>
    %cst_17 = arith.constant 1.000000e+00 : f32
    %31 = vector.broadcast %cst_17 : f32 to vector<8x10xf32>
    %32 = arith.addf %31, %30 : vector<8x10xf32>
    %33 = arith.divf %31, %32 : vector<8x10xf32>
    %c0_18 = arith.constant 0 : index
    %c0_19 = arith.constant 0 : index
    %34 = vector.load %arg8[%c0_18, %c0_19] : memref<8x10xf32, #tpu.memory_space<vmem>>, vector<8x10xf32>
    tpu.vector_store %arg8[%c0_18, %c0_19], %33 {strides = array<i32>} : memref<8x10xf32, #tpu.memory_space<vmem>>, vector<8x10xf32>,
    return
  }
  func.func @transform_0(%arg0: i32) -> (i32, i32) {
    %c0_i32 = arith.constant 0 : i32
    %c0_i32_0 = arith.constant 0 : i32
    return %arg0, %c0_i32 : i32, i32
  }
  func.func @transform_1(%arg0: i32) -> (i32, i32) {
    %c0_i32 = arith.constant 0 : i32
    %c0_i32_0 = arith.constant 0 : i32
    %c0_i32_1 = arith.constant 0 : i32
    return %c0_i32, %c0_i32_0 : i32, i32
  }
  func.func @transform_2(%arg0: i32) -> (i32, i32) {
    %c0_i32 = arith.constant 0 : i32
    %c0_i32_0 = arith.constant 0 : i32
    %c0_i32_1 = arith.constant 0 : i32
    return %c0_i32, %c0_i32_0 : i32, i32
  }
  func.func @transform_3(%arg0: i32) -> (i32, i32) {
    %c0_i32 = arith.constant 0 : i32
    %c0_i32_0 = arith.constant 0 : i32
    %c0_i32_1 = arith.constant 0 : i32
    return %c0_i32, %c0_i32_0 : i32, i32
  }
  func.func @transform_4(%arg0: i32) -> (i32, i32) {
    %c0_i32 = arith.constant 0 : i32
    %c0_i32_0 = arith.constant 0 : i32
    %c0_i32_1 = arith.constant 0 : i32
    return %c0_i32, %c0_i32_0 : i32, i32
  }
  func.func @transform_5(%arg0: i32) -> (i32, i32) {
    %c0_i32 = arith.constant 0 : i32
    %c0_i32_0 = arith.constant 0 : i32
    %c0_i32_1 = arith.constant 0 : i32
    return %c0_i32, %c0_i32_0 : i32, i32
  }
  func.func @transform_6(%arg0: i32) -> (i32, i32) {
    %c0_i32 = arith.constant 0 : i32
    %c0_i32_0 = arith.constant 0 : i32
    %c0_i32_1 = arith.constant 0 : i32
    return %c0_i32, %c0_i32_0 : i32, i32
  }
  func.func @transform_7(%arg0: i32) -> (i32, i32) {
    %c0_i32 = arith.constant 0 : i32
    %c0_i32_0 = arith.constant 0 : i32
    return %arg0, %c0_i32 : i32, i32
  }
}

</mosaic_0001>

<llo_original>
// kernel: neural_network_forward.1
$region0: #{neural_network_forward.1}
  #allocation0 [shape = 'u32[]', space=smem, size = 0x4, offset = 0x4, fixed_abs, tag = 'smem constant byte address 0x4 - core index']
  #allocation1 [shape = 'u32[72,128]{1,0:T(1,128)}', space=vmem, size = 0x9000, scoped, tag = 'internal scratch']
  %s0 = inlined_call_operand.vmem [shape: f32[8,784], index: 0, kind: input, shape index: {}]
  %s1 = inlined_call_operand.hbm [shape: bf16[784,128], index: 1, kind: input, shape index: {}]
  %s2 = inlined_call_operand.vmem [shape: f32[1,128], index: 2, kind: input, shape index: {}]
  %s3 = inlined_call_operand.vmem [shape: bf16[128,128], index: 3, kind: input, shape index: {}]
  %s4 = inlined_call_operand.vmem [shape: f32[1,128], index: 4, kind: input, shape index: {}]
  %s5 = inlined_call_operand.vmem [shape: bf16[128,10], index: 5, kind: input, shape index: {}]
  %s6 = inlined_call_operand.vmem [shape: f32[1,10], index: 6, kind: input, shape index: {}]
  %s7 = inlined_call_operand.vmem [shape: f32[8,10], index: 7, kind: output, shape index: {}]
  %s8 = sld [smem:[#allocation0]]
  $region42: #{neural_network_forward.1} parent=0
    _
  %s10 = ssub.s32 1, %s8
  %s11 = scalar_select 0, %s10, %s8
  $region1: #{neural_network_forward.1} parent=0
    #allocation2 [shape = 'u8[200704]{0}', space=vmem, size = 0x31000, scoped, tag = 'input window, operand 1, single buffered']
    #allocation3 [shape = 's32[1]{0}', space=sflag, size = 0x4, scoped, tag = 'scoped memory for neural_network_forward.1']
    %12 = vsyncpa [#allocation3], 0
    // Predicated region
    $region2: #{neural_network_forward.1} parent=1 // pred_check
      _
    $region3: #{neural_network_forward.1} parent=1 // pred_check_branch
      %14 = sbr.rel (0) target = $region5
    $region4: #{neural_network_forward.1} parent=1 // pred_region
      _
    $region5: #{neural_network_forward.1} parent=1 // pred_fallthru
      _
    // Predicated region
    $region6: #{neural_network_forward.1} parent=1 // pred_check
      _
    $region7: #{neural_network_forward.1} parent=1 // pred_check_branch
      %16 = sbr.rel (0) target = $region9
    $region8: #{neural_network_forward.1} parent=1 // pred_region
      %18 = vsyncadd [#allocation3], 0
      %s19 = sshll.u32 %s1, 4
      %s20 = int_to_ptr.hbm [resolvable:$true] %s19
      %s21 = sshll.u32 [#allocation2], 4
      %s22 = int_to_ptr.vmem [resolvable:$true] %s21
      %27 = dma.hbm_to_vmem [thread:$0]  %s20, 6272, %s22, [#allocation3], 64, 64, 4
    $region9: #{neural_network_forward.1} parent=1 // pred_fallthru
      _
    // Predicated region
    $region10: #{neural_network_forward.1} parent=1 // pred_check
      _
    $region11: #{neural_network_forward.1} parent=1 // pred_check_branch
      %29 = sbr.rel (0) target = $region13
    $region12: #{neural_network_forward.1} parent=1 // pred_region
      _
    $region13: #{neural_network_forward.1} parent=1 // pred_fallthru
      _
    // Predicated region
    $region14: #{neural_network_forward.1} parent=1 // pred_check
      _
    $region15: #{neural_network_forward.1} parent=1 // pred_check_branch
      %31 = sbr.rel (0) target = $region17
    $region16: #{neural_network_forward.1} parent=1 // pred_region
      _
    $region17: #{neural_network_forward.1} parent=1 // pred_fallthru
      _
    // Predicated region
    $region18: #{neural_network_forward.1} parent=1 // pred_check
      _
    $region19: #{neural_network_forward.1} parent=1 // pred_check_branch
      %33 = sbr.rel (0) target = $region21
    $region20: #{neural_network_forward.1} parent=1 // pred_region
      _
    $region21: #{neural_network_forward.1} parent=1 // pred_fallthru
      _
    // Predicated region
    $region22: #{neural_network_forward.1} parent=1 // pred_check
      _
    $region23: #{neural_network_forward.1} parent=1 // pred_check_branch
      %35 = sbr.rel (0) target = $region25
    $region24: #{neural_network_forward.1} parent=1 // pred_region
      _
    $region25: #{neural_network_forward.1} parent=1 // pred_fallthru
      _
    // Predicated region
    $region26: #{neural_network_forward.1} parent=1 // pred_check
      _
    $region27: #{neural_network_forward.1} parent=1 // pred_check_branch
      %37 = sbr.rel (0) target = $region29
    $region28: #{neural_network_forward.1} parent=1 // pred_region
      _
    $region29: #{neural_network_forward.1} parent=1 // pred_fallthru
      _
    // Predicated region
    $region30: #{neural_network_forward.1} parent=1 // pred_check
      _
    $region31: #{neural_network_forward.1} parent=1 // pred_check_branch
      %39 = sbr.rel (0) target = $region33
    $region32: #{neural_network_forward.1} parent=1 // pred_region
      %41 = dma.done [#allocation3], 6272
    $region33: #{neural_network_forward.1} parent=1 // pred_fallthru
      _
    %v43 = vld [vmem:[%s0] sm:$0xff]
    %v44 = vld [vmem:[%s0 + $0x8] sm:$0xff]
    %v45 = vld [vmem:[%s0 + $0x10] sm:$0xff]
    %v46 = vld [vmem:[%s0 + $0x18] sm:$0xff]
    %v47 = vld [vmem:[%s0 + $0x20] sm:$0xff]
    %v48 = vld [vmem:[%s0 + $0x28] sm:$0xff]
    %v49 = vld [vmem:[%s0 + $0x30] sm:$0xff]
    %v50 = vpack.c.bf16 %v43, %v43
    %v51 = vpack.c.bf16 %v44, %v44
    %v52 = vpack.c.bf16 %v45, %v45
    %v53 = vpack.c.bf16 %v46, %v46
    %v54 = vpack.c.bf16 %v47, %v47
    %v55 = vpack.c.bf16 %v48, %v48
    %v56 = vpack.c.bf16 %v49, %v49
    %v57 = vld [vmem:[#allocation2] sm:$0xf]
    %v58 = vld [vmem:[#allocation2 + $0x4] sm:$0xf]
    %v59 = vld [vmem:[#allocation2 + $0x8] sm:$0xf]
    %v60 = vld [vmem:[#allocation2 + $0xc] sm:$0xf]
    %v61 = vld [vmem:[#allocation2 + $0x10] sm:$0xf]
    %v62 = vld [vmem:[#allocation2 + $0x14] sm:$0xf]
    %v63 = vld [vmem:[#allocation2 + $0x18] sm:$0xf]
    %v64 = vld [vmem:[#allocation2 + $0x1c] sm:$0xf]
    %v65 = vld [vmem:[#allocation2 + $0x20] sm:$0xf]
    %v66 = vld [vmem:[#allocation2 + $0x24] sm:$0xf]
    %v67 = vld [vmem:[#allocation2 + $0x28] sm:$0xf]
    %v68 = vld [vmem:[#allocation2 + $0x2c] sm:$0xf]
    %v69 = vld [vmem:[#allocation2 + $0x30] sm:$0xf]
    %v70 = vld [vmem:[#allocation2 + $0x34] sm:$0xf]
    %v71 = vld [vmem:[#allocation2 + $0x38] sm:$0xf]
    %v72 = vld [vmem:[#allocation2 + $0x3c] sm:$0xf]
    %v73 = vld [vmem:[#allocation2 + $0x40] sm:$0xf]
    %v74 = vld [vmem:[#allocation2 + $0x44] sm:$0xf]
    %v75 = vld [vmem:[#allocation2 + $0x48] sm:$0xf]
    %v76 = vld [vmem:[#allocation2 + $0x4c] sm:$0xf]
    %v77 = vld [vmem:[#allocation2 + $0x50] sm:$0xf]
    %v78 = vld [vmem:[#allocation2 + $0x54] sm:$0xf]
    %v79 = vld [vmem:[#allocation2 + $0x58] sm:$0xf]
    %v80 = vld [vmem:[#allocation2 + $0x5c] sm:$0xf]
    %v81 = vld [vmem:[#allocation2 + $0x60] sm:$0xf]
    %v82 = vld [vmem:[#allocation2 + $0x64] sm:$0xf]
    %v83 = vld [vmem:[#allocation2 + $0x68] sm:$0xf]
    %v84 = vld [vmem:[#allocation2 + $0x6c] sm:$0xf]
    %v85 = vld [vmem:[#allocation2 + $0x70] sm:$0xf]
    %v86 = vld [vmem:[#allocation2 + $0x74] sm:$0xf]
    %v87 = vld [vmem:[#allocation2 + $0x78] sm:$0xf]
    %v88 = vld [vmem:[#allocation2 + $0x7c] sm:$0xf]
    %v89 = vld [vmem:[#allocation2 + $0x80] sm:$0xf]
    %v90 = vld [vmem:[#allocation2 + $0x84] sm:$0xf]
    %v91 = vld [vmem:[#allocation2 + $0x88] sm:$0xf]
    %v92 = vld [vmem:[#allocation2 + $0x8c] sm:$0xf]
    %v93 = vld [vmem:[#allocation2 + $0x90] sm:$0xf]
    %v94 = vld [vmem:[#allocation2 + $0x94] sm:$0xf]
    %v95 = vld [vmem:[#allocation2 + $0x98] sm:$0xf]
    %v96 = vld [vmem:[#allocation2 + $0x9c] sm:$0xf]
    %v97 = vld [vmem:[#allocation2 + $0xa0] sm:$0xf]
    %v98 = vld [vmem:[#allocation2 + $0xa4] sm:$0xf]
    %v99 = vld [vmem:[#allocation2 + $0xa8] sm:$0xf]
    %v100 = vld [vmem:[#allocation2 + $0xac] sm:$0xf]
    %v101 = vld [vmem:[#allocation2 + $0xb0] sm:$0xf]
    %v102 = vld [vmem:[#allocation2 + $0xb4] sm:$0xf]
    %v103 = vld [vmem:[#allocation2 + $0xb8] sm:$0xf]
    %v104 = vld [vmem:[#allocation2 + $0xbc] sm:$0xf]
    %v105 = vld [vmem:[#allocation2 + $0xc0] sm:$0xf]
    %v106 = vld [vmem:[#allocation2 + $0xc4] sm:$0xf]
    %v107 = vld [vmem:[#allocation2 + $0xc8] sm:$0xf]
    %v108 = vld [vmem:[#allocation2 + $0xcc] sm:$0xf]
    %v109 = vld [vmem:[#allocation2 + $0xd0] sm:$0xf]
    %v110 = vld [vmem:[#allocation2 + $0xd4] sm:$0xf]
    %v111 = vld [vmem:[#allocation2 + $0xd8] sm:$0xf]
    %v112 = vld [vmem:[#allocation2 + $0xdc] sm:$0xf]
    %v113 = vld [vmem:[#allocation2 + $0xe0] sm:$0xf]
    %v114 = vld [vmem:[#allocation2 + $0xe4] sm:$0xf]
    %v115 = vld [vmem:[#allocation2 + $0xe8] sm:$0xf]
    %v116 = vld [vmem:[#allocation2 + $0xec] sm:$0xf]
    %v117 = vld [vmem:[#allocation2 + $0xf0] sm:$0xf]
    %v118 = vld [vmem:[#allocation2 + $0xf4] sm:$0xf]
    %v119 = vld [vmem:[#allocation2 + $0xf8] sm:$0xf]
    %v120 = vld [vmem:[#allocation2 + $0xfc] sm:$0xf]
    %v121 = vld [vmem:[#allocation2 + $0x100] sm:$0xf]
    %v122 = vld [vmem:[#allocation2 + $0x104] sm:$0xf]
    %v123 = vld [vmem:[#allocation2 + $0x108] sm:$0xf]
    %v124 = vld [vmem:[#allocation2 + $0x10c] sm:$0xf]
    %v125 = vld [vmem:[#allocation2 + $0x110] sm:$0xf]
    %v126 = vld [vmem:[#allocation2 + $0x114] sm:$0xf]
    %v127 = vld [vmem:[#allocation2 + $0x118] sm:$0xf]
    %v128 = vld [vmem:[#allocation2 + $0x11c] sm:$0xf]
    %v129 = vld [vmem:[#allocation2 + $0x120] sm:$0xf]
    %v130 = vld [vmem:[#allocation2 + $0x124] sm:$0xf]
    %v131 = vld [vmem:[#allocation2 + $0x128] sm:$0xf]
    %v132 = vld [vmem:[#allocation2 + $0x12c] sm:$0xf]
    %v133 = vld [vmem:[#allocation2 + $0x130] sm:$0xf]
    %v134 = vld [vmem:[#allocation2 + $0x134] sm:$0xf]
    %v135 = vld [vmem:[#allocation2 + $0x138] sm:$0xf]
    %v136 = vld [vmem:[#allocation2 + $0x13c] sm:$0xf]
    %v137 = vld [vmem:[#allocation2 + $0x140] sm:$0xf]
    %v138 = vld [vmem:[#allocation2 + $0x144] sm:$0xf]
    %v139 = vld [vmem:[#allocation2 + $0x148] sm:$0xf]
    %v140 = vld [vmem:[#allocation2 + $0x14c] sm:$0xf]
    %v141 = vld [vmem:[#allocation2 + $0x150] sm:$0xf]
    %v142 = vld [vmem:[#allocation2 + $0x154] sm:$0xf]
    %v143 = vld [vmem:[#allocation2 + $0x158] sm:$0xf]
    %v144 = vld [vmem:[#allocation2 + $0x15c] sm:$0xf]
    %v145 = vld [vmem:[#allocation2 + $0x160] sm:$0xf]
    %v146 = vld [vmem:[#allocation2 + $0x164] sm:$0xf]
    %v147 = vld [vmem:[#allocation2 + $0x168] sm:$0xf]
    %v148 = vld [vmem:[#allocation2 + $0x16c] sm:$0xf]
    %v149 = vld [vmem:[#allocation2 + $0x170] sm:$0xf]
    %v150 = vld [vmem:[#allocation2 + $0x174] sm:$0xf]
    %v151 = vld [vmem:[#allocation2 + $0x178] sm:$0xf]
    %v152 = vld [vmem:[#allocation2 + $0x17c] sm:$0xf]
    %v153 = vld [vmem:[#allocation2 + $0x180] sm:$0xf]
    %v154 = vld [vmem:[#allocation2 + $0x184] sm:$0xf]
    %v155 = vld [vmem:[%s2] sm:$0x1]
    %v157 = vperm.slane %v155, 0
    %v257 = vunpack.c.l.b16 %v57
    %v258 = vunpack.c.l.b16 %v58
    %v259 = vunpack.c.l.b16 %v59
    %v260 = vunpack.c.l.b16 %v60
    %v261 = vunpack.c.l.b16 %v61
    %v262 = vunpack.c.l.b16 %v62
    %v263 = vunpack.c.l.b16 %v63
    %v264 = vunpack.c.l.b16 %v64
    %v265 = vunpack.c.l.b16 %v65
    %v266 = vunpack.c.l.b16 %v66
    %v267 = vunpack.c.l.b16 %v67
    %v268 = vunpack.c.l.b16 %v68
    %v269 = vunpack.c.l.b16 %v69
    %v270 = vunpack.c.l.b16 %v70
    %v271 = vunpack.c.l.b16 %v71
    %v272 = vunpack.c.l.b16 %v72
    %v273 = vunpack.c.l.b16 %v73
    %v274 = vunpack.c.l.b16 %v74
    %v275 = vunpack.c.l.b16 %v75
    %v276 = vunpack.c.l.b16 %v76
    %v277 = vunpack.c.l.b16 %v77
    %v278 = vunpack.c.l.b16 %v78
    %v279 = vunpack.c.l.b16 %v79
    %v280 = vunpack.c.l.b16 %v80
    %v281 = vunpack.c.l.b16 %v81
    %v282 = vunpack.c.l.b16 %v82
    %v283 = vunpack.c.l.b16 %v83
    %v284 = vunpack.c.l.b16 %v84
    %v285 = vunpack.c.l.b16 %v85
    %v286 = vunpack.c.l.b16 %v86
    %v287 = vunpack.c.l.b16 %v87
    %v288 = vunpack.c.l.b16 %v88
    %v289 = vunpack.c.l.b16 %v89
    %v290 = vunpack.c.l.b16 %v90
    %v291 = vunpack.c.l.b16 %v91
    %v292 = vunpack.c.l.b16 %v92
    %v293 = vunpack.c.l.b16 %v93
    %v294 = vunpack.c.l.b16 %v94
    %v295 = vunpack.c.l.b16 %v95
    %v296 = vunpack.c.l.b16 %v96
    %v297 = vunpack.c.l.b16 %v97
    %v298 = vunpack.c.l.b16 %v98
    %v299 = vunpack.c.l.b16 %v99
    %v300 = vunpack.c.l.b16 %v100
    %v301 = vunpack.c.l.b16 %v101
    %v302 = vunpack.c.l.b16 %v102
    %v303 = vunpack.c.l.b16 %v103
    %v304 = vunpack.c.l.b16 %v104
    %v305 = vunpack.c.l.b16 %v105
    %v306 = vunpack.c.l.b16 %v106
    %v307 = vunpack.c.l.b16 %v107
    %v308 = vunpack.c.l.b16 %v108
    %v309 = vunpack.c.l.b16 %v109
    %v310 = vunpack.c.l.b16 %v110
    %v311 = vunpack.c.l.b16 %v111
    %v312 = vunpack.c.l.b16 %v112
    %v313 = vunpack.c.l.b16 %v113
    %v314 = vunpack.c.l.b16 %v114
    %v315 = vunpack.c.l.b16 %v115
    %v316 = vunpack.c.l.b16 %v116
    %v317 = vunpack.c.l.b16 %v117
    %v318 = vunpack.c.l.b16 %v118
    %v319 = vunpack.c.l.b16 %v119
    %v320 = vunpack.c.l.b16 %v120
    %v321 = vunpack.c.l.b16 %v121
    %v322 = vunpack.c.l.b16 %v122
    %v323 = vunpack.c.l.b16 %v123
    %v324 = vunpack.c.l.b16 %v124
    %v325 = vunpack.c.l.b16 %v125
    %v326 = vunpack.c.l.b16 %v126
    %v327 = vunpack.c.l.b16 %v127
    %v328 = vunpack.c.l.b16 %v128
    %v329 = vunpack.c.l.b16 %v129
    %v330 = vunpack.c.l.b16 %v130
    %v331 = vunpack.c.l.b16 %v131
    %v332 = vunpack.c.l.b16 %v132
    %v333 = vunpack.c.l.b16 %v133
    %v334 = vunpack.c.l.b16 %v134
    %v335 = vunpack.c.l.b16 %v135
    %v336 = vunpack.c.l.b16 %v136
    %v337 = vunpack.c.l.b16 %v137
    %v338 = vunpack.c.l.b16 %v138
    %v339 = vunpack.c.l.b16 %v139
    %v340 = vunpack.c.l.b16 %v140
    %v341 = vunpack.c.l.b16 %v141
    %v342 = vunpack.c.l.b16 %v142
    %v343 = vunpack.c.l.b16 %v143
    %v344 = vunpack.c.l.b16 %v144
    %v345 = vunpack.c.l.b16 %v145
    %v346 = vunpack.c.l.b16 %v146
    %v347 = vunpack.c.l.b16 %v147
    %v348 = vunpack.c.l.b16 %v148
    %v349 = vunpack.c.l.b16 %v149
    %v350 = vunpack.c.l.b16 %v150
    %v351 = vunpack.c.l.b16 %v151
    %v352 = vunpack.c.l.b16 %v152
    %v353 = vunpack.c.l.b16 %v153
    %v354 = vunpack.c.l.b16 %v154
    %v355 = vpack.c.b16 %v258, %v257
    %v356 = vpack.c.b16 %v260, %v259
    %v357 = vpack.c.b16 %v262, %v261
    %v358 = vpack.c.b16 %v264, %v263
    %v359 = vpack.c.b16 %v266, %v265
    %v360 = vpack.c.b16 %v268, %v267
    %v361 = vpack.c.b16 %v270, %v269
    %v362 = vpack.c.b16 %v272, %v271
    %v363 = vpack.c.b16 %v274, %v273
    %v364 = vpack.c.b16 %v276, %v275
    %v365 = vpack.c.b16 %v278, %v277
    %v366 = vpack.c.b16 %v280, %v279
    %v367 = vpack.c.b16 %v282, %v281
    %v368 = vpack.c.b16 %v284, %v283
    %v369 = vpack.c.b16 %v286, %v285
    %v370 = vpack.c.b16 %v288, %v287
    %v371 = vpack.c.b16 %v290, %v289
    %v372 = vpack.c.b16 %v292, %v291
    %v373 = vpack.c.b16 %v294, %v293
    %v374 = vpack.c.b16 %v296, %v295
    %v375 = vpack.c.b16 %v298, %v297
    %v376 = vpack.c.b16 %v300, %v299
    %v377 = vpack.c.b16 %v302, %v301
    %v378 = vpack.c.b16 %v304, %v303
    %v379 = vpack.c.b16 %v306, %v305
    %v380 = vpack.c.b16 %v308, %v307
    %v381 = vpack.c.b16 %v310, %v309
    %v382 = vpack.c.b16 %v312, %v311
    %v383 = vpack.c.b16 %v314, %v313
    %v384 = vpack.c.b16 %v316, %v315
    %v385 = vpack.c.b16 %v318, %v317
    %v386 = vpack.c.b16 %v320, %v319
    %v387 = vpack.c.b16 %v322, %v321
    %v388 = vpack.c.b16 %v324, %v323
    %v389 = vpack.c.b16 %v326, %v325
    %v390 = vpack.c.b16 %v328, %v327
    %v391 = vpack.c.b16 %v330, %v329
    %v392 = vpack.c.b16 %v332, %v331
    %v393 = vpack.c.b16 %v334, %v333
    %v394 = vpack.c.b16 %v336, %v335
    %v395 = vpack.c.b16 %v338, %v337
    %v396 = vpack.c.b16 %v340, %v339
    %v397 = vpack.c.b16 %v342, %v341
    %v398 = vpack.c.b16 %v344, %v343
    %v399 = vpack.c.b16 %v346, %v345
    %v400 = vpack.c.b16 %v348, %v347
    %v401 = vpack.c.b16 %v350, %v349
    %v402 = vpack.c.b16 %v352, %v351
    %v403 = vpack.c.b16 %v354, %v353
    %vm453 = vcmask 130048
    %v455 = vsel %vm453, %v56, 0
    %457 = vmatpush.bf16.msra.mxu0 %v362
    %458 = vmatpush.bf16.msra.mxu0 %v361
    %459 = vmatpush.bf16.msra.mxu0 %v360
    %460 = vmatpush.bf16.msra.mxu0 %v359
    %461 = vmatpush.bf16.msra.mxu0 %v358
    %462 = vmatpush.bf16.msra.mxu0 %v357
    %463 = vmatpush.bf16.msra.mxu0 %v356
    %464 = vmatpush.bf16.msra.mxu0 %v355
    %465 = vmatmul.bf16.gmra.mxu0 %v50
    %v466 = vpop.f32.mrf.mxu0
    %v467 = vadd.f32 %v157, %v466
    %v468 = vpop.f32.mrf.mxu0
    %469 = vdwg.mxu0
    %470 = vmatpush.bf16.msra.mxu0 %v370
    %471 = vmatpush.bf16.msra.mxu0 %v369
    %472 = vmatpush.bf16.msra.mxu0 %v368
    %473 = vmatpush.bf16.msra.mxu0 %v367
    %474 = vmatpush.bf16.msra.mxu0 %v366
    %475 = vmatpush.bf16.msra.mxu0 %v365
    %476 = vmatpush.bf16.msra.mxu0 %v364
    %477 = vmatpush.bf16.msra.mxu0 %v363
    %478 = vmatmul.bf16.gmra.mxu0 %v51
    %v479 = vpop.f32.mrf.mxu0
    %v480 = vadd.f32 %v467, %v479
    %v481 = vpop.f32.mrf.mxu0
    %482 = vdwg.mxu0
    %483 = vmatpush.bf16.msra.mxu0 %v378
    %484 = vmatpush.bf16.msra.mxu0 %v377
    %485 = vmatpush.bf16.msra.mxu0 %v376
    %486 = vmatpush.bf16.msra.mxu0 %v375
    %487 = vmatpush.bf16.msra.mxu0 %v374
    %488 = vmatpush.bf16.msra.mxu0 %v373
    %489 = vmatpush.bf16.msra.mxu0 %v372
    %490 = vmatpush.bf16.msra.mxu0 %v371
    %491 = vmatmul.bf16.gmra.mxu0 %v52
    %v492 = vpop.f32.mrf.mxu0
    %v493 = vadd.f32 %v480, %v492
    %v494 = vpop.f32.mrf.mxu0
    %495 = vdwg.mxu0
    %496 = vmatpush.bf16.msra.mxu0 %v386
    %497 = vmatpush.bf16.msra.mxu0 %v385
    %498 = vmatpush.bf16.msra.mxu0 %v384
    %499 = vmatpush.bf16.msra.mxu0 %v383
    %500 = vmatpush.bf16.msra.mxu0 %v382
    %501 = vmatpush.bf16.msra.mxu0 %v381
    %502 = vmatpush.bf16.msra.mxu0 %v380
    %503 = vmatpush.bf16.msra.mxu0 %v379
    %504 = vmatmul.bf16.gmra.mxu0 %v53
    %v505 = vpop.f32.mrf.mxu0
    %v506 = vadd.f32 %v493, %v505
    %v507 = vpop.f32.mrf.mxu0
    %508 = vdwg.mxu0
    %509 = vmatpush.bf16.msra.mxu0 %v394
    %510 = vmatpush.bf16.msra.mxu0 %v393
    %511 = vmatpush.bf16.msra.mxu0 %v392
    %512 = vmatpush.bf16.msra.mxu0 %v391
    %513 = vmatpush.bf16.msra.mxu0 %v390
    %514 = vmatpush.bf16.msra.mxu0 %v389
    %515 = vmatpush.bf16.msra.mxu0 %v388
    %516 = vmatpush.bf16.msra.mxu0 %v387
    %517 = vmatmul.bf16.gmra.mxu0 %v54
    %v518 = vpop.f32.mrf.mxu0
    %v519 = vadd.f32 %v506, %v518
    %v520 = vpop.f32.mrf.mxu0
    %521 = vdwg.mxu0
    %522 = vmatpush.bf16.msra.mxu0 %v402
    %523 = vmatpush.bf16.msra.mxu0 %v401
    %524 = vmatpush.bf16.msra.mxu0 %v400
    %525 = vmatpush.bf16.msra.mxu0 %v399
    %526 = vmatpush.bf16.msra.mxu0 %v398
    %527 = vmatpush.bf16.msra.mxu0 %v397
    %528 = vmatpush.bf16.msra.mxu0 %v396
    %529 = vmatpush.bf16.msra.mxu0 %v395
    %530 = vmatmul.bf16.gmra.mxu0 %v55
    %v531 = vpop.f32.mrf.mxu0
    %v532 = vadd.f32 %v519, %v531
    %v533 = vpop.f32.mrf.mxu0
    %534 = vdwg.mxu0
    %535 = vmatpush.bf16.msra.mxu0 0
    %536 = vmatpush.bf16.msra.mxu0 0
    %537 = vmatpush.bf16.msra.mxu0 0
    %538 = vmatpush.bf16.msra.mxu0 0
    %539 = vmatpush.bf16.msra.mxu0 0
    %540 = vmatpush.bf16.msra.mxu0 0
    %541 = vmatpush.bf16.msra.mxu0 0
    %542 = vmatpush.bf16.msra.mxu0 %v403
    %543 = vmatmul.bf16.gmra.mxu0 %v455
    %v544 = vpop.f32.mrf.mxu0
    %v545 = vadd.f32 %v532, %v544
    %v546 = vpop.f32.mrf.mxu0
    %547 = vdwg.mxu0
    %v548 = vxor.u32 %v545, 2147483648
    %v549 = vmul.f32 %v548, 1.442695
    %v550 = vpow.pop %v549
    %v551 = vadd.f32 %v550, 1.0
    %v552 = vrcp.pop %v551
    %v553 = vmul.f32 %v551, %v552
    %v554 = vsub.f32 1.0, %v553
    %v555 = vmul.f32 %v552, %v554
    %v556 = vadd.f32 %v552, %v555
    %vm557 = vweird.f32 %v551
    %vm558 = vweird.f32 %v552
    %vm559 = vmor %vm557, %vm558
    %v560 = vsel %vm559, %v552, %v556
    %v561 = vand.u32 2147483647, %v551
    %vm562 = vcmp.eq.f32.partialorder %v561, 8.507059e+37
    %v563 = vand.u32 %v551, 2147483648
    %v564 = vor.u32 1.1754944e-38, %v563
    %v565 = vsel %vm562, %v564, %v560
    %v566 = vmul.f32 1.0, %v565
    %v567 = vpack.c.bf16 %v566, %v566
    %v568 = vld [vmem:[%s3] sm:$0xf]
    %v569 = vld [vmem:[%s3 + $0x4] sm:$0xf]
    %v570 = vld [vmem:[%s3 + $0x8] sm:$0xf]
    %v571 = vld [vmem:[%s3 + $0xc] sm:$0xf]
    %v572 = vld [vmem:[%s3 + $0x10] sm:$0xf]
    %v573 = vld [vmem:[%s3 + $0x14] sm:$0xf]
    %v574 = vld [vmem:[%s3 + $0x18] sm:$0xf]
    %v575 = vld [vmem:[%s3 + $0x1c] sm:$0xf]
    %v576 = vld [vmem:[%s3 + $0x20] sm:$0xf]
    %v577 = vld [vmem:[%s3 + $0x24] sm:$0xf]
    %v578 = vld [vmem:[%s3 + $0x28] sm:$0xf]
    %v579 = vld [vmem:[%s3 + $0x2c] sm:$0xf]
    %v580 = vld [vmem:[%s3 + $0x30] sm:$0xf]
    %v581 = vld [vmem:[%s3 + $0x34] sm:$0xf]
    %v582 = vld [vmem:[%s3 + $0x38] sm:$0xf]
    %v583 = vld [vmem:[%s3 + $0x3c] sm:$0xf]
    %v584 = vld [vmem:[%s4] sm:$0x1]
    %v586 = vperm.slane %v584, 0
    %v604 = vunpack.c.l.b16 %v568
    %v605 = vunpack.c.l.b16 %v569
    %v606 = vunpack.c.l.b16 %v570
    %v607 = vunpack.c.l.b16 %v571
    %v608 = vunpack.c.l.b16 %v572
    %v609 = vunpack.c.l.b16 %v573
    %v610 = vunpack.c.l.b16 %v574
    %v611 = vunpack.c.l.b16 %v575
    %v612 = vunpack.c.l.b16 %v576
    %v613 = vunpack.c.l.b16 %v577
    %v614 = vunpack.c.l.b16 %v578
    %v615 = vunpack.c.l.b16 %v579
    %v616 = vunpack.c.l.b16 %v580
    %v617 = vunpack.c.l.b16 %v581
    %v618 = vunpack.c.l.b16 %v582
    %v619 = vunpack.c.l.b16 %v583
    %v620 = vpack.c.b16 %v605, %v604
    %v621 = vpack.c.b16 %v607, %v606
    %v622 = vpack.c.b16 %v609, %v608
    %v623 = vpack.c.b16 %v611, %v610
    %v624 = vpack.c.b16 %v613, %v612
    %v625 = vpack.c.b16 %v615, %v614
    %v626 = vpack.c.b16 %v617, %v616
    %v627 = vpack.c.b16 %v619, %v618
    %636 = vmatpush.bf16.msra.mxu0 %v627
    %637 = vmatpush.bf16.msra.mxu0 %v626
    %638 = vmatpush.bf16.msra.mxu0 %v625
    %639 = vmatpush.bf16.msra.mxu0 %v624
    %640 = vmatpush.bf16.msra.mxu0 %v623
    %641 = vmatpush.bf16.msra.mxu0 %v622
    %642 = vmatpush.bf16.msra.mxu0 %v621
    %643 = vmatpush.bf16.msra.mxu0 %v620
    %644 = vmatmul.bf16.gmra.mxu0 %v567
    %v645 = vpop.f32.mrf.mxu0
    %v646 = vadd.f32 %v586, %v645
    %v647 = vpop.f32.mrf.mxu0
    %648 = vdwg.mxu0
    %v649 = vxor.u32 %v646, 2147483648
    %v650 = vmul.f32 %v649, 1.442695
    %v651 = vpow.pop %v650
    %v652 = vadd.f32 %v651, 1.0
    %v653 = vrcp.pop %v652
    %v654 = vmul.f32 %v652, %v653
    %v655 = vsub.f32 1.0, %v654
    %v656 = vmul.f32 %v653, %v655
    %v657 = vadd.f32 %v653, %v656
    %vm658 = vweird.f32 %v652
    %vm659 = vweird.f32 %v653
    %vm660 = vmor %vm658, %vm659
    %v661 = vsel %vm660, %v653, %v657
    %v662 = vand.u32 2147483647, %v652
    %vm663 = vcmp.eq.f32.partialorder %v662, 8.507059e+37
    %v664 = vand.u32 %v652, 2147483648
    %v665 = vor.u32 1.1754944e-38, %v664
    %v666 = vsel %vm663, %v665, %v661
    %v667 = vmul.f32 1.0, %v666
    %v668 = vpack.c.bf16 %v667, %v667
    %v669 = vld [vmem:[%s5] sm:$0xf]
    %v670 = vld [vmem:[%s5 + $0x4] sm:$0xf]
    %v671 = vld [vmem:[%s5 + $0x8] sm:$0xf]
    %v672 = vld [vmem:[%s5 + $0xc] sm:$0xf]
    %v673 = vld [vmem:[%s5 + $0x10] sm:$0xf]
    %v674 = vld [vmem:[%s5 + $0x14] sm:$0xf]
    %v675 = vld [vmem:[%s5 + $0x18] sm:$0xf]
    %v676 = vld [vmem:[%s5 + $0x1c] sm:$0xf]
    %v677 = vld [vmem:[%s5 + $0x20] sm:$0xf]
    %v678 = vld [vmem:[%s5 + $0x24] sm:$0xf]
    %v679 = vld [vmem:[%s5 + $0x28] sm:$0xf]
    %v680 = vld [vmem:[%s5 + $0x2c] sm:$0xf]
    %v681 = vld [vmem:[%s5 + $0x30] sm:$0xf]
    %v682 = vld [vmem:[%s5 + $0x34] sm:$0xf]
    %v683 = vld [vmem:[%s5 + $0x38] sm:$0xf]
    %v684 = vld [vmem:[%s5 + $0x3c] sm:$0xf]
    %v685 = vld [vmem:[%s6] sm:$0x1]
    %v687 = vperm.slane %v685, 0
    %v705 = vunpack.c.l.b16 %v669
    %v706 = vunpack.c.l.b16 %v670
    %v707 = vunpack.c.l.b16 %v671
    %v708 = vunpack.c.l.b16 %v672
    %v709 = vunpack.c.l.b16 %v673
    %v710 = vunpack.c.l.b16 %v674
    %v711 = vunpack.c.l.b16 %v675
    %v712 = vunpack.c.l.b16 %v676
    %v713 = vunpack.c.l.b16 %v677
    %v714 = vunpack.c.l.b16 %v678
    %v715 = vunpack.c.l.b16 %v679
    %v716 = vunpack.c.l.b16 %v680
    %v717 = vunpack.c.l.b16 %v681
    %v718 = vunpack.c.l.b16 %v682
    %v719 = vunpack.c.l.b16 %v683
    %v720 = vunpack.c.l.b16 %v684
    %v721 = vpack.c.b16 %v706, %v705
    %v722 = vpack.c.b16 %v708, %v707
    %v723 = vpack.c.b16 %v710, %v709
    %v724 = vpack.c.b16 %v712, %v711
    %v725 = vpack.c.b16 %v714, %v713
    %v726 = vpack.c.b16 %v716, %v715
    %v727 = vpack.c.b16 %v718, %v717
    %v728 = vpack.c.b16 %v720, %v719
    %737 = vmatpush.bf16.msra.mxu0 %v728
    %738 = vmatpush.bf16.msra.mxu0 %v727
    %739 = vmatpush.bf16.msra.mxu0 %v726
    %740 = vmatpush.bf16.msra.mxu0 %v725
    %741 = vmatpush.bf16.msra.mxu0 %v724
    %742 = vmatpush.bf16.msra.mxu0 %v723
    %743 = vmatpush.bf16.msra.mxu0 %v722
    %744 = vmatpush.bf16.msra.mxu0 %v721
    %745 = vmatmul.bf16.gmra.mxu0 %v668
    %v746 = vpop.f32.mrf.mxu0
    %v747 = vadd.f32 %v687, %v746
    %v748 = vpop.f32.mrf.mxu0
    %749 = vdwg.mxu0
    %v750 = vxor.u32 %v747, 2147483648
    %v751 = vmul.f32 %v750, 1.442695
    %v752 = vpow.pop %v751
    %v753 = vadd.f32 %v752, 1.0
    %v754 = vrcp.pop %v753
    %v755 = vmul.f32 %v753, %v754
    %v756 = vsub.f32 1.0, %v755
    %v757 = vmul.f32 %v754, %v756
    %v758 = vadd.f32 %v754, %v757
    %vm759 = vweird.f32 %v753
    %vm760 = vweird.f32 %v754
    %vm761 = vmor %vm759, %vm760
    %v762 = vsel %vm761, %v754, %v758
    %v763 = vand.u32 2147483647, %v753
    %vm764 = vcmp.eq.f32.partialorder %v763, 8.507059e+37
    %v765 = vand.u32 %v753, 2147483648
    %v766 = vor.u32 1.1754944e-38, %v765
    %v767 = vsel %vm764, %v766, %v762
    %v768 = vmul.f32 1.0, %v767
    %vm769 = vcmask 80896
    %770 = vst.msk [vmem:[%s7] sm:$0xff] %vm769, %v768
    // Predicated region
    $region34: #{neural_network_forward.1} parent=1 // pred_check
      _
    $region35: #{neural_network_forward.1} parent=1 // pred_check_branch
      %772 = sbr.rel (0) target = $region37
    $region36: #{neural_network_forward.1} parent=1 // pred_region
      _
    $region37: #{neural_network_forward.1} parent=1 // pred_fallthru
      _
    // Predicated region
    $region38: #{neural_network_forward.1} parent=1 // pred_check
      _
    $region39: #{neural_network_forward.1} parent=1 // pred_check_branch
      %774 = sbr.rel (0) target = $region41
    $region40: #{neural_network_forward.1} parent=1 // pred_region
      _
    $region41: #{neural_network_forward.1} parent=1 // pred_fallthru
      _
    %775 = vsyncpa [#allocation3], 1

</llo_original>
